<compile_context>
chip_gen: v6e
topology: v6e:2x2x1
jax: 0.10.0
libtpu: 0.0.40
codegen_flags: <defaults>
</compile_context>

<pallas_src>
import functools

import jax
import jax.numpy as jnp
import numpy as np
from jax.experimental import pallas as pl
from jax.experimental.pallas import tpu as pltpu


# Use the modes-in-lanes VPU path when Cin*Cout is at most ~32x32.
_VPU_CHANNEL_THRESHOLD = 1024


def _round_up(x, m):
    return ((x + m - 1) // m) * m


def _sublane(dtype):
    """Sublane tile for a dtype: 8 rows for f32, 16 for bf16, 32 for int8/fp8."""
    return max(8, 32 // np.dtype(dtype).itemsize)


def _largest_divisor_leq(n, cap):
    """Largest divisor of `n` that is <= cap (>=1). n, cap are Python ints."""
    cap = int(max(1, min(cap, n)))
    for d in range(cap, 0, -1):
        if n % d == 0:
            return d
    return 1


def _vmem_budget_bytes():
    """(tile working-set budget, scoped vmem limit) adapted to the chip."""
    try:
        vmem = int(pltpu.get_tpu_info().vmem_capacity_bytes)
    except Exception:
        vmem = 64 * 1024 * 1024          # conservative: v7x has 64 MiB / TC
    # Generous budget on 128-MiB chips (v5e/v6e), conservative 1/3 on v7x.
    budget = vmem // 2 if vmem >= 96 * 1024 * 1024 else vmem // 3
    limit = min(int(vmem * 3 // 4), 128 * 1024 * 1024)
    return budget, limit


# ---------------------------------------------------------------------------
# Kernels
# ---------------------------------------------------------------------------
def _spectral_vpu_kernel(xr_ref, xi_ref, wr_ref, wi_ref, or_ref, oi_ref):
    """Modes-in-lanes complex contraction on the VPU (small channel counts).

    xr_ref, xi_ref : (B, Cin, TM)     real / imag of truncated rFFT, M in lanes
    wr_ref, wi_ref : (Cin, Cout, TM)  real / imag weights (PyTorch layout)
    or_ref, oi_ref : (B, Cout, TM)    float32 outputs
    """
    xr = xr_ref[...].astype(jnp.float32)
    xi = xi_ref[...].astype(jnp.float32)
    wr = wr_ref[...].astype(jnp.float32)
    wi = wi_ref[...].astype(jnp.float32)
    cin = xr.shape[1]

    acc_r = jnp.zeros(or_ref.shape, jnp.float32)
    acc_i = jnp.zeros(oi_ref.shape, jnp.float32)
    # Static (small) reduction over Cin; per-i live intermediates are only
    # (B, Cout, TM) so VMEM/vreg pressure stays low.
    for i in range(cin):
        xr_i = xr[:, i:i + 1, :]              # (B, 1, TM)
        xi_i = xi[:, i:i + 1, :]
        wr_i = wr[i:i + 1]                    # (1, Cout, TM)
        wi_i = wi[i:i + 1]
        acc_r = acc_r + (xr_i * wr_i - xi_i * wi_i)
        acc_i = acc_i + (xr_i * wi_i + xi_i * wr_i)
    or_ref[...] = acc_r
    oi_ref[...] = acc_i


def _spectral_mxu_kernel(x_ref, w_ref, o_ref, *, bp, cout):
    """Fused complex contraction on the MXU (mode-major, xr/xi stacked on rows).

    x_ref : (TM, 2*Bp, Cin)    rows [0:Bp]=real, [Bp:2Bp]=imag
    w_ref : (TM, Cin, 2*Cout)  lanes [0:Cout]=wr, [Cout:2Cout]=wi
    o_ref : (TM, Bp, 2*Cout)   f32, [real | imag] along lanes
    """
    # One batched MXU pass per mode tile (was two einsums / four matmuls).
    z = jnp.einsum('mbi,mio->mbo', x_ref[...], w_ref[...],
                   preferred_element_type=jnp.float32)
    real = z[:, :bp, :cout] - z[:, bp:, cout:]     # xr@wr - xi@wi
    imag = z[:, :bp, cout:] + z[:, bp:, :cout]     # xr@wi + xi@wr
    o_ref[...] = jnp.concatenate([real, imag], axis=-1)


# ---------------------------------------------------------------------------
# Module
# ---------------------------------------------------------------------------
class SpectralConv1d:
    """JAX/Pallas port of the PyTorch SpectralConv1d module."""

    def __init__(self, in_channels, out_channels, modes1, key,
                 compute_dtype=jnp.bfloat16):
        self.in_channels = in_channels
        self.out_channels = out_channels
        self.modes1 = modes1
        self.compute_dtype = compute_dtype

        scale = 1.0 / (in_channels * out_channels)
        kr, ki = jax.random.split(key)
        # torch.rand(..., dtype=torch.cfloat) samples real & imag parts U[0,1)
        wr = scale * jax.random.uniform(
            kr, (in_channels, out_channels, modes1), jnp.float32)
        wi = scale * jax.random.uniform(
            ki, (in_channels, out_channels, modes1), jnp.float32)
        self.weights1 = (wr + 1j * wi).astype(jnp.complex64)

        self._use_vpu = (in_channels * out_channels) <= _VPU_CHANNEL_THRESHOLD
        if self._use_vpu:
            # Modes-in-lanes layout (Cin, Cout, Mp): the natural PyTorch weight
            # layout, no transpose, no Cout padding.  The mode axis is padded
            # to a 128-lane multiple ONCE here, and only if M > 128 (i.e. only
            # when the kernel has to tile the lane axis).
            self._mp = modes1 if modes1 <= 128 else _round_up(modes1, 128)
            pad = ((0, 0), (0, 0), (0, self._mp - modes1))
            self._wr = jnp.pad(wr, pad).astype(compute_dtype)
            self._wi = jnp.pad(wi, pad).astype(compute_dtype)
        else:
            # Mode-major MXU layout (M, Cin, 2*Cout) = [wr | wi] along lanes.
            # No 128-lane padding of Cout: blocks always cover the full channel
            # axes, so masked stores replace the old 8-32x padded writeback.
            wr_m = jnp.transpose(wr, (2, 0, 1))
            wi_m = jnp.transpose(wi, (2, 0, 1))
            self._wcat = jnp.concatenate([wr_m, wi_m], axis=-1).astype(
                compute_dtype)

    # -- modes-in-lanes VPU path -------------------------------------------
    def _forward_vpu(self, xr, xi):
        B = xr.shape[0]
        cin, cout, M = self.in_channels, self.out_channels, self.modes1
        mp = self._mp
        if mp != M:
            # Cheap activation-only lane pad (weights were pre-padded at init).
            pad = ((0, 0), (0, 0), (0, mp - M))
            xr = jnp.pad(xr, pad)
            xi = jnp.pad(xi, pad)

        unit = mp if mp <= 128 else 128          # lane-tile unit
        q = mp // unit

        it = np.dtype(self.compute_dtype).itemsize
        s_in = _sublane(self.compute_dtype)
        budget, vmem_limit = _vmem_budget_bytes()
        lane = _round_up(unit, 128)
        # Honest per-lane-tile accounting: padded sublanes/lanes + f32 accs.
        io_tile = (2 * B * _round_up(cin, s_in) * lane * it          # xr, xi
                   + 2 * cin * _round_up(cout, s_in) * lane * it     # wr, wi
                   + 2 * B * _round_up(cout, 8) * lane * 4)          # outputs
        tmp_tile = 4 * B * _round_up(cout, 8) * lane * 4             # acc + temps
        d_fit = max(1, budget // (2 * io_tile + tmp_tile))           # 2x dbl-buf
        d_cap = min(d_fit, max(1, (q + 3) // 4))   # >=4 grid steps when q >= 4
        d = _largest_divisor_leq(q, d_cap)
        tm = unit * d
        grid = (q // d,)

        out_r, out_i = pl.pallas_call(
            _spectral_vpu_kernel,
            out_shape=(jax.ShapeDtypeStruct((B, cout, mp), jnp.float32),
                       jax.ShapeDtypeStruct((B, cout, mp), jnp.float32)),
            grid=grid,
            in_specs=[
                pl.BlockSpec((B, cin, tm), lambda i: (0, 0, i)),
                pl.BlockSpec((B, cin, tm), lambda i: (0, 0, i)),
                pl.BlockSpec((cin, cout, tm), lambda i: (0, 0, i)),
                pl.BlockSpec((cin, cout, tm), lambda i: (0, 0, i)),
            ],
            out_specs=(pl.BlockSpec((B, cout, tm), lambda i: (0, 0, i)),
                       pl.BlockSpec((B, cout, tm), lambda i: (0, 0, i))),
            compiler_params=pltpu.CompilerParams(
                dimension_semantics=("parallel",),
                vmem_limit_bytes=vmem_limit),
        )(xr, xi, self._wr, self._wi)
        return out_r[:, :, :M], out_i[:, :, :M]

    # -- mode-major MXU path -------------------------------------------------
    def _forward_mxu(self, xr, xi):
        B = xr.shape[0]
        cin, cout, M = self.in_channels, self.out_channels, self.modes1
        s_in = _sublane(self.compute_dtype)
        bp = _round_up(max(B, 1), s_in)          # dtype-aware sublane pad of B

        # TODO(synk): fold this mode-major transpose into the kernel BlockSpec.
        xr_m = jnp.transpose(xr, (2, 0, 1))      # (M, B, Cin)
        xi_m = jnp.transpose(xi, (2, 0, 1))
        if bp != B:
            pad = ((0, 0), (0, bp - B), (0, 0))
            xr_m = jnp.pad(xr_m, pad)
            xi_m = jnp.pad(xi_m, pad)
        # Stack real/imag along the sublane axis -> one MXU pass per mode tile.
        x_cat = jnp.concatenate([xr_m, xi_m], axis=1)        # (M, 2*Bp, Cin)

        it = np.dtype(self.compute_dtype).itemsize
        budget, vmem_limit = _vmem_budget_bytes()
        # Honest per-mode accounting: lane/sublane padding + f32 intermediates.
        io_mode = (_round_up(2 * bp, s_in) * _round_up(cin, 128) * it    # X
                   + _round_up(cin, s_in) * _round_up(2 * cout, 128) * it  # W
                   + _round_up(bp, 8) * _round_up(2 * cout, 128) * 4)    # out
        tmp_mode = 3 * _round_up(2 * bp, 8) * _round_up(2 * cout, 128) * 4
        tm_fit = max(1, budget // (2 * io_mode + tmp_mode))
        cap = min(tm_fit, max(1, (M + 3) // 4))  # >=4 grid steps (2x v7x cores)
        tm = _largest_divisor_leq(M, cap)        # exact divisor: no mode pad
        grid = (M // tm,)

        out = pl.pallas_call(
            functools.partial(_spectral_mxu_kernel, bp=bp, cout=cout),
            out_shape=jax.ShapeDtypeStruct((M, bp, 2 * cout), jnp.float32),
            grid=grid,
            in_specs=[
                pl.BlockSpec((tm, 2 * bp, cin), lambda i: (i, 0, 0)),
                pl.BlockSpec((tm, cin, 2 * cout), lambda i: (i, 0, 0)),
            ],
            out_specs=pl.BlockSpec((tm, bp, 2 * cout), lambda i: (i, 0, 0)),
            compiler_params=pltpu.CompilerParams(
                dimension_semantics=("parallel",),
                vmem_limit_bytes=vmem_limit),
        )(x_cat, self._wcat)
        o_r = jnp.transpose(out[:, :B, :cout], (1, 2, 0))    # (B, Cout, M)
        o_i = jnp.transpose(out[:, :B, cout:], (1, 2, 0))
        return o_r, o_i

    # -- forward --------------------------------------------------------------
    def __call__(self, x):
        # x: (B, Cin, N) float32
        B, cin, N = x.shape
        assert cin == self.in_channels
        M = self.modes1
        nf = N // 2 + 1

        # TODO(synk): rfft/irfft have no Pallas TPU primitive; they remain XLA
        # (jnp.fft) glue around the Pallas spectral-multiply kernel.
        x_ft = jnp.fft.rfft(x, axis=-1)[:, :, :M]            # (B, Cin, M) c64
        xr = jnp.real(x_ft).astype(self.compute_dtype)
        xi = jnp.imag(x_ft).astype(self.compute_dtype)

        if self._use_vpu:
            o_r, o_i = self._forward_vpu(xr, xi)              # (B, Cout, M) f32
        else:
            o_r, o_i = self._forward_mxu(xr, xi)

        out_m = (o_r + 1j * o_i).astype(jnp.complex64)
        out_ft = jnp.zeros((B, self.out_channels, nf), jnp.complex64)
        out_ft = out_ft.at[:, :, :M].set(out_m)
        return jnp.fft.irfft(out_ft, n=N, axis=-1)            # (B, Cout, N) f32


def _reference_forward(x, weights1, modes1, out_channels):
    """Pure-JAX reference matching the PyTorch forward exactly."""
    B, Cin, N = x.shape
    x_ft = jnp.fft.rfft(x, axis=-1)
    out_ft = jnp.zeros((B, out_channels, N // 2 + 1), jnp.complex64)
    prod = jnp.einsum('bix,iox->box', x_ft[:, :, :modes1], weights1)
    out_ft = out_ft.at[:, :, :modes1].set(prod)
    return jnp.fft.irfft(out_ft, n=N, axis=-1)


if __name__ == "__main__":
    key = jax.random.PRNGKey(0)
    k_x, k_w, k_x2, k_w2, k_x3, k_w3 = jax.random.split(key, 6)

    # 1) Small-channel FNO config -> modes-in-lanes VPU path (no transposes,
    #    no Cout/batch padding).  Strict f32 check, then the default bf16 path.
    B, C_in, C_out, N, modes1 = 2, 4, 4, 16, 4
    x = jax.random.normal(k_x, (B, C_in, N), dtype=jnp.float32)

    layer_f32 = SpectralConv1d(C_in, C_out, modes1, k_w,
                               compute_dtype=jnp.float32)
    assert layer_f32._use_vpu
    y32 = jax.block_until_ready(layer_f32(x))
    y_ref = jax.block_until_ready(
        _reference_forward(x, layer_f32.weights1, modes1, C_out))
    assert y32.shape == (B, C_out, N), y32.shape
    np.testing.assert_allclose(np.asarray(y32), np.asarray(y_ref),
                               rtol=1e-4, atol=1e-5)

    layer_bf16 = SpectralConv1d(C_in, C_out, modes1, k_w,
                                compute_dtype=jnp.bfloat16)
    y16 = jax.block_until_ready(layer_bf16(x))
    assert y16.shape == (B, C_out, N), y16.shape
    np.testing.assert_allclose(np.asarray(y16), np.asarray(y_ref),
                               rtol=1e-1, atol=2e-2)

    # 2) Larger channel count -> fused single-einsum MXU path (xr/xi stacked
    #    along sublanes, unpadded Cout, mode-tiled grid with >=4 steps).
    B2, C_in2, C_out2, N2, modes2 = 2, 64, 40, 32, 12
    x2 = jax.random.normal(k_x2, (B2, C_in2, N2), dtype=jnp.float32)
    layer2 = SpectralConv1d(C_in2, C_out2, modes2, k_w2,
                            compute_dtype=jnp.float32)
    assert not layer2._use_vpu
    y2 = jax.block_until_ready(layer2(x2))
    y2_ref = jax.block_until_ready(
        _reference_forward(x2, layer2.weights1, modes2, C_out2))
    assert y2.shape == (B2, C_out2, N2), y2.shape
    np.testing.assert_allclose(np.asarray(y2), np.asarray(y2_ref),
                               rtol=1e-4, atol=1e-5)

    # 3) Mode count > 128 -> lane-tiled VPU path (weights pre-padded at init,
    #    128-lane mode tiles, multi-step grid).
    B3, C_in3, C_out3, N3, modes3 = 2, 4, 4, 384, 160
    x3 = jax.random.normal(k_x3, (B3, C_in3, N3), dtype=jnp.float32)
    layer3 = SpectralConv1d(C_in3, C_out3, modes3, k_w3,
                            compute_dtype=jnp.float32)
    assert layer3._use_vpu and layer3._mp == 256
    y3 = jax.block_until_ready(layer3(x3))
    y3_ref = jax.block_until_ready(
        _reference_forward(x3, layer3.weights1, modes3, C_out3))
    assert y3.shape == (B3, C_out3, N3), y3.shape
    np.testing.assert_allclose(np.asarray(y3), np.asarray(y3_ref),
                               rtol=1e-4, atol=1e-5)

    print("KERNEL_OK")
</pallas_src>

<mosaic_0001>
module attributes {stable_mosaic.version = 11 : i64} {
  func.func @_spectral_vpu_kernel(%arg0: i32, %arg1: memref<2x4x4xf32, #tpu.memory_space<vmem>>, %arg2: memref<2x4x4xf32, #tpu.memory_space<vmem>>, %arg3: memref<4x4x4xf32, #tpu.memory_space<vmem>>, %arg4: memref<4x4x4xf32, #tpu.memory_space<vmem>>, %arg5: memref<2x4x4xf32, #tpu.memory_space<vmem>>, %arg6: memref<2x4x4xf32, #tpu.memory_space<vmem>>) attributes {dimension_semantics = [#tpu.dimension_semantics<parallel>], iteration_bounds = array<i64: 1>, scalar_prefetch = 0 : i64, scratch_operands = 0 : i64, tpu.core_type = #tpu.core_type<tc>, window_params = [{transform_indices = @transform_0, window_bounds = array<i64: 2, 4, 4>}, {transform_indices = @transform_1, window_bounds = array<i64: 2, 4, 4>}, {transform_indices = @transform_2, window_bounds = array<i64: 4, 4, 4>}, {transform_indices = @transform_3, window_bounds = array<i64: 4, 4, 4>}, {transform_indices = @transform_4, window_bounds = array<i64: 2, 4, 4>}, {transform_indices = @transform_5, window_bounds = array<i64: 2, 4, 4>}]} {
    %c0 = arith.constant 0 : index
    %c0_0 = arith.constant 0 : index
    %c0_1 = arith.constant 0 : index
    %0 = vector.load %arg1[%c0, %c0_0, %c0_1] : memref<2x4x4xf32, #tpu.memory_space<vmem>>, vector<2x4x4xf32>
    %c0_2 = arith.constant 0 : index
    %c0_3 = arith.constant 0 : index
    %c0_4 = arith.constant 0 : index
    %1 = vector.load %arg2[%c0_2, %c0_3, %c0_4] : memref<2x4x4xf32, #tpu.memory_space<vmem>>, vector<2x4x4xf32>
    %c0_5 = arith.constant 0 : index
    %c0_6 = arith.constant 0 : index
    %c0_7 = arith.constant 0 : index
    %2 = vector.load %arg3[%c0_5, %c0_6, %c0_7] : memref<4x4x4xf32, #tpu.memory_space<vmem>>, vector<4x4x4xf32>
    %c0_8 = arith.constant 0 : index
    %c0_9 = arith.constant 0 : index
    %c0_10 = arith.constant 0 : index
    %3 = vector.load %arg4[%c0_8, %c0_9, %c0_10] : memref<4x4x4xf32, #tpu.memory_space<vmem>>, vector<4x4x4xf32>
    %cst = arith.constant 0.000000e+00 : f32
    %4 = vector.broadcast %cst : f32 to vector<2x4x4xf32>
    %cst_11 = arith.constant 0.000000e+00 : f32
    %5 = vector.broadcast %cst_11 : f32 to vector<2x4x4xf32>
    %6 = vector.extract_strided_slice %0 {offsets = [0, 0, 0], sizes = [2, 1, 4], strides = [1, 1, 1]} : vector<2x4x4xf32> to vector<2x1x4xf32>
    %7 = vector.extract_strided_slice %1 {offsets = [0, 0, 0], sizes = [2, 1, 4], strides = [1, 1, 1]} : vector<2x4x4xf32> to vector<2x1x4xf32>
    %8 = vector.extract_strided_slice %2 {offsets = [0, 0, 0], sizes = [1, 4, 4], strides = [1, 1, 1]} : vector<4x4x4xf32> to vector<1x4x4xf32>
    %9 = vector.extract_strided_slice %3 {offsets = [0, 0, 0], sizes = [1, 4, 4], strides = [1, 1, 1]} : vector<4x4x4xf32> to vector<1x4x4xf32>
    %10 = vector.broadcast %6 : vector<2x1x4xf32> to vector<2x4x4xf32>
    %11 = vector.broadcast %8 : vector<1x4x4xf32> to vector<2x4x4xf32>
    %12 = arith.mulf %10, %11 : vector<2x4x4xf32>
    %13 = vector.broadcast %7 : vector<2x1x4xf32> to vector<2x4x4xf32>
    %14 = vector.broadcast %9 : vector<1x4x4xf32> to vector<2x4x4xf32>
    %15 = arith.mulf %13, %14 : vector<2x4x4xf32>
    %16 = arith.subf %12, %15 : vector<2x4x4xf32>
    %17 = arith.addf %4, %16 : vector<2x4x4xf32>
    %18 = vector.broadcast %6 : vector<2x1x4xf32> to vector<2x4x4xf32>
    %19 = vector.broadcast %9 : vector<1x4x4xf32> to vector<2x4x4xf32>
    %20 = arith.mulf %18, %19 : vector<2x4x4xf32>
    %21 = vector.broadcast %7 : vector<2x1x4xf32> to vector<2x4x4xf32>
    %22 = vector.broadcast %8 : vector<1x4x4xf32> to vector<2x4x4xf32>
    %23 = arith.mulf %21, %22 : vector<2x4x4xf32>
    %24 = arith.addf %20, %23 : vector<2x4x4xf32>
    %25 = arith.addf %5, %24 : vector<2x4x4xf32>
    %26 = vector.extract_strided_slice %0 {offsets = [0, 1, 0], sizes = [2, 1, 4], strides = [1, 1, 1]} : vector<2x4x4xf32> to vector<2x1x4xf32>
    %27 = vector.extract_strided_slice %1 {offsets = [0, 1, 0], sizes = [2, 1, 4], strides = [1, 1, 1]} : vector<2x4x4xf32> to vector<2x1x4xf32>
    %28 = vector.extract_strided_slice %2 {offsets = [1, 0, 0], sizes = [1, 4, 4], strides = [1, 1, 1]} : vector<4x4x4xf32> to vector<1x4x4xf32>
    %29 = vector.extract_strided_slice %3 {offsets = [1, 0, 0], sizes = [1, 4, 4], strides = [1, 1, 1]} : vector<4x4x4xf32> to vector<1x4x4xf32>
    %30 = vector.broadcast %26 : vector<2x1x4xf32> to vector<2x4x4xf32>
    %31 = vector.broadcast %28 : vector<1x4x4xf32> to vector<2x4x4xf32>
    %32 = arith.mulf %30, %31 : vector<2x4x4xf32>
    %33 = vector.broadcast %27 : vector<2x1x4xf32> to vector<2x4x4xf32>
    %34 = vector.broadcast %29 : vector<1x4x4xf32> to vector<2x4x4xf32>
    %35 = arith.mulf %33, %34 : vector<2x4x4xf32>
    %36 = arith.subf %32, %35 : vector<2x4x4xf32>
    %37 = arith.addf %17, %36 : vector<2x4x4xf32>
    %38 = vector.broadcast %26 : vector<2x1x4xf32> to vector<2x4x4xf32>
    %39 = vector.broadcast %29 : vector<1x4x4xf32> to vector<2x4x4xf32>
    %40 = arith.mulf %38, %39 : vector<2x4x4xf32>
    %41 = vector.broadcast %27 : vector<2x1x4xf32> to vector<2x4x4xf32>
    %42 = vector.broadcast %28 : vector<1x4x4xf32> to vector<2x4x4xf32>
    %43 = arith.mulf %41, %42 : vector<2x4x4xf32>
    %44 = arith.addf %40, %43 : vector<2x4x4xf32>
    %45 = arith.addf %25, %44 : vector<2x4x4xf32>
    %46 = vector.extract_strided_slice %0 {offsets = [0, 2, 0], sizes = [2, 1, 4], strides = [1, 1, 1]} : vector<2x4x4xf32> to vector<2x1x4xf32>
    %47 = vector.extract_strided_slice %1 {offsets = [0, 2, 0], sizes = [2, 1, 4], strides = [1, 1, 1]} : vector<2x4x4xf32> to vector<2x1x4xf32>
    %48 = vector.extract_strided_slice %2 {offsets = [2, 0, 0], sizes = [1, 4, 4], strides = [1, 1, 1]} : vector<4x4x4xf32> to vector<1x4x4xf32>
    %49 = vector.extract_strided_slice %3 {offsets = [2, 0, 0], sizes = [1, 4, 4], strides = [1, 1, 1]} : vector<4x4x4xf32> to vector<1x4x4xf32>
    %50 = vector.broadcast %46 : vector<2x1x4xf32> to vector<2x4x4xf32>
    %51 = vector.broadcast %48 : vector<1x4x4xf32> to vector<2x4x4xf32>
    %52 = arith.mulf %50, %51 : vector<2x4x4xf32>
    %53 = vector.broadcast %47 : vector<2x1x4xf32> to vector<2x4x4xf32>
    %54 = vector.broadcast %49 : vector<1x4x4xf32> to vector<2x4x4xf32>
    %55 = arith.mulf %53, %54 : vector<2x4x4xf32>
    %56 = arith.subf %52, %55 : vector<2x4x4xf32>
    %57 = arith.addf %37, %56 : vector<2x4x4xf32>
    %58 = vector.broadcast %46 : vector<2x1x4xf32> to vector<2x4x4xf32>
    %59 = vector.broadcast %49 : vector<1x4x4xf32> to vector<2x4x4xf32>
    %60 = arith.mulf %58, %59 : vector<2x4x4xf32>
    %61 = vector.broadcast %47 : vector<2x1x4xf32> to vector<2x4x4xf32>
    %62 = vector.broadcast %48 : vector<1x4x4xf32> to vector<2x4x4xf32>
    %63 = arith.mulf %61, %62 : vector<2x4x4xf32>
    %64 = arith.addf %60, %63 : vector<2x4x4xf32>
    %65 = arith.addf %45, %64 : vector<2x4x4xf32>
    %66 = vector.extract_strided_slice %0 {offsets = [0, 3, 0], sizes = [2, 1, 4], strides = [1, 1, 1]} : vector<2x4x4xf32> to vector<2x1x4xf32>
    %67 = vector.extract_strided_slice %1 {offsets = [0, 3, 0], sizes = [2, 1, 4], strides = [1, 1, 1]} : vector<2x4x4xf32> to vector<2x1x4xf32>
    %68 = vector.extract_strided_slice %2 {offsets = [3, 0, 0], sizes = [1, 4, 4], strides = [1, 1, 1]} : vector<4x4x4xf32> to vector<1x4x4xf32>
    %69 = vector.extract_strided_slice %3 {offsets = [3, 0, 0], sizes = [1, 4, 4], strides = [1, 1, 1]} : vector<4x4x4xf32> to vector<1x4x4xf32>
    %70 = vector.broadcast %66 : vector<2x1x4xf32> to vector<2x4x4xf32>
    %71 = vector.broadcast %68 : vector<1x4x4xf32> to vector<2x4x4xf32>
    %72 = arith.mulf %70, %71 : vector<2x4x4xf32>
    %73 = vector.broadcast %67 : vector<2x1x4xf32> to vector<2x4x4xf32>
    %74 = vector.broadcast %69 : vector<1x4x4xf32> to vector<2x4x4xf32>
    %75 = arith.mulf %73, %74 : vector<2x4x4xf32>
    %76 = arith.subf %72, %75 : vector<2x4x4xf32>
    %77 = arith.addf %57, %76 : vector<2x4x4xf32>
    %78 = vector.broadcast %66 : vector<2x1x4xf32> to vector<2x4x4xf32>
    %79 = vector.broadcast %69 : vector<1x4x4xf32> to vector<2x4x4xf32>
    %80 = arith.mulf %78, %79 : vector<2x4x4xf32>
    %81 = vector.broadcast %67 : vector<2x1x4xf32> to vector<2x4x4xf32>
    %82 = vector.broadcast %68 : vector<1x4x4xf32> to vector<2x4x4xf32>
    %83 = arith.mulf %81, %82 : vector<2x4x4xf32>
    %84 = arith.addf %80, %83 : vector<2x4x4xf32>
    %85 = arith.addf %65, %84 : vector<2x4x4xf32>
    %c0_12 = arith.constant 0 : index
    %c0_13 = arith.constant 0 : index
    %c0_14 = arith.constant 0 : index
    %86 = vector.load %arg5[%c0_12, %c0_13, %c0_14] : memref<2x4x4xf32, #tpu.memory_space<vmem>>, vector<2x4x4xf32>
    tpu.vector_store %arg5[%c0_12, %c0_13, %c0_14], %77 {strides = array<i32>} : memref<2x4x4xf32, #tpu.memory_space<vmem>>, vector<2x4x4xf32>,
    %c0_15 = arith.constant 0 : index
    %c0_16 = arith.constant 0 : index
    %c0_17 = arith.constant 0 : index
    %87 = vector.load %arg6[%c0_15, %c0_16, %c0_17] : memref<2x4x4xf32, #tpu.memory_space<vmem>>, vector<2x4x4xf32>
    tpu.vector_store %arg6[%c0_15, %c0_16, %c0_17], %85 {strides = array<i32>} : memref<2x4x4xf32, #tpu.memory_space<vmem>>, vector<2x4x4xf32>,
    return
  }
  func.func @transform_0(%arg0: i32) -> (i32, i32, i32) {
    %c0_i32 = arith.constant 0 : i32
    %c0_i32_0 = arith.constant 0 : i32
    %c0_i32_1 = arith.constant 0 : i32
    return %c0_i32, %c0_i32_0, %arg0 : i32, i32, i32
  }
  func.func @transform_1(%arg0: i32) -> (i32, i32, i32) {
    %c0_i32 = arith.constant 0 : i32
    %c0_i32_0 = arith.constant 0 : i32
    %c0_i32_1 = arith.constant 0 : i32
    return %c0_i32, %c0_i32_0, %arg0 : i32, i32, i32
  }
  func.func @transform_2(%arg0: i32) -> (i32, i32, i32) {
    %c0_i32 = arith.constant 0 : i32
    %c0_i32_0 = arith.constant 0 : i32
    %c0_i32_1 = arith.constant 0 : i32
    return %c0_i32, %c0_i32_0, %arg0 : i32, i32, i32
  }
  func.func @transform_3(%arg0: i32) -> (i32, i32, i32) {
    %c0_i32 = arith.constant 0 : i32
    %c0_i32_0 = arith.constant 0 : i32
    %c0_i32_1 = arith.constant 0 : i32
    return %c0_i32, %c0_i32_0, %arg0 : i32, i32, i32
  }
  func.func @transform_4(%arg0: i32) -> (i32, i32, i32) {
    %c0_i32 = arith.constant 0 : i32
    %c0_i32_0 = arith.constant 0 : i32
    %c0_i32_1 = arith.constant 0 : i32
    return %c0_i32, %c0_i32_0, %arg0 : i32, i32, i32
  }
  func.func @transform_5(%arg0: i32) -> (i32, i32, i32) {
    %c0_i32 = arith.constant 0 : i32
    %c0_i32_0 = arith.constant 0 : i32
    %c0_i32_1 = arith.constant 0 : i32
    return %c0_i32, %c0_i32_0, %arg0 : i32, i32, i32
  }
}

</mosaic_0001>

<llo_original>
// kernel: tpu_custom_call.1
$region0: #{tpu_custom_call.1}
  #allocation0 [shape = 'u32[]', space=smem, size = 0x4, offset = 0x4, fixed_abs, tag = 'smem constant byte address 0x4 - core index']
  #allocation1 [shape = 'u32[144,128]{1,0:T(1,128)}', space=vmem, size = 0x12000, scoped, tag = 'internal scratch']
  %s0 = inlined_call_operand.hbm [shape: f32[2,4,4], index: 0, kind: input, shape index: {}]
  %s1 = inlined_call_operand.hbm [shape: f32[2,4,4], index: 1, kind: input, shape index: {}]
  %s2 = inlined_call_operand.hbm [shape: f32[4,4,4], index: 2, kind: input, shape index: {}]
  %s3 = inlined_call_operand.hbm [shape: f32[4,4,4], index: 3, kind: input, shape index: {}]
  %s4 = inlined_call_operand.hbm [shape: f32[2,4,4], index: 4, kind: output, shape index: {0}]
  %s5 = inlined_call_operand.hbm [shape: f32[2,4,4], index: 5, kind: output, shape index: {1}]
  %6 = xla_tuple %s4, %s5
  %s7 = sld [smem:[#allocation0]]
  $region50: #{tpu_custom_call.1} parent=0
    _
  %s9 = ssub.s32 1, %s7
  %s10 = scalar_select 0, %s9, %s7
  $region1: #{tpu_custom_call.1} parent=0
    #allocation2 [shape = 'u8[4096]{0}', space=vmem, size = 0x1000, scoped, tag = 'input window, operand 0, single buffered']
    #allocation3 [shape = 's32[1]{0}', space=sflag, size = 0x4, scoped, tag = 'scoped memory for tpu_custom_call.1']
    #allocation4 [shape = 's32[1]{0}', space=sflag, size = 0x4, scoped, tag = 'scoped memory for tpu_custom_call.1']
    #allocation5 [shape = 'u8[4096]{0}', space=vmem, size = 0x1000, scoped, tag = 'input window, operand 1, single buffered']
    #allocation6 [shape = 's32[1]{0}', space=sflag, size = 0x4, scoped, tag = 'scoped memory for tpu_custom_call.1']
    #allocation7 [shape = 'u8[8192]{0}', space=vmem, size = 0x2000, scoped, tag = 'input window, operand 2, single buffered']
    #allocation8 [shape = 'u8[8192]{0}', space=vmem, size = 0x2000, scoped, tag = 'input window, operand 3, single buffered']
    #allocation9 [shape = 's32[1]{0}', space=sflag, size = 0x4, scoped, tag = 'scoped memory for tpu_custom_call.1']
    #allocation10 [shape = 'u8[4096]{0}', space=vmem, size = 0x1000, scoped, tag = 'output window, operand 0, single buffered']
    #allocation11 [shape = 'u8[4096]{0}', space=vmem, size = 0x1000, scoped, tag = 'output window, operand 1, single buffered']
    #allocation12 [shape = 's32[1]{0}', space=sflag, size = 0x4, scoped, tag = 'scoped memory for tpu_custom_call.1']
    %11 = vsyncpa [#allocation3], 0
    %12 = vsyncpa [#allocation6], 0
    %13 = vsyncpa [#allocation9], 0
    %14 = vsyncpa [#allocation4], 0
    %15 = vsyncpa [#allocation12], 0
    // Predicated region
    $region2: #{tpu_custom_call.1} parent=1 // pred_check
      _
    $region3: #{tpu_custom_call.1} parent=1 // pred_check_branch
      %17 = sbr.rel (0) target = $region5
    $region4: #{tpu_custom_call.1} parent=1 // pred_region
      %s19 = ssub.s32 128, 128
      %20 = vsyncadd [#allocation3], %s19
      %s21 = sshll.u32 [#allocation2], 4
      %s22 = int_to_ptr.vmem [resolvable:$true] %s21
      %27 = dma.hbm_to_vmem [thread:$0]  %s0, 128, %s22, [#allocation3], 64, 64, 4
    $region5: #{tpu_custom_call.1} parent=1 // pred_fallthru
      _
    // Predicated region
    $region6: #{tpu_custom_call.1} parent=1 // pred_check
      _
    $region7: #{tpu_custom_call.1} parent=1 // pred_check_branch
      %29 = sbr.rel (0) target = $region9
    $region8: #{tpu_custom_call.1} parent=1 // pred_region
      %s31 = ssub.s32 128, 128
      %32 = vsyncadd [#allocation6], %s31
      %s33 = sshll.u32 [#allocation5], 4
      %s34 = int_to_ptr.vmem [resolvable:$true] %s33
      %39 = dma.hbm_to_vmem [thread:$0]  %s1, 128, %s34, [#allocation6], 64, 64, 4
    $region9: #{tpu_custom_call.1} parent=1 // pred_fallthru
      _
    // Predicated region
    $region10: #{tpu_custom_call.1} parent=1 // pred_check
      _
    $region11: #{tpu_custom_call.1} parent=1 // pred_check_branch
      %41 = sbr.rel (0) target = $region13
    $region12: #{tpu_custom_call.1} parent=1 // pred_region
      %s43 = ssub.s32 256, 256
      %44 = vsyncadd [#allocation6], %s43
      %s45 = sshll.u32 [#allocation7], 4
      %s46 = int_to_ptr.vmem [resolvable:$true] %s45
      %51 = dma.hbm_to_vmem [thread:$0]  %s2, 256, %s46, [#allocation6], 64, 64, 4
    $region13: #{tpu_custom_call.1} parent=1 // pred_fallthru
      _
    // Predicated region
    $region14: #{tpu_custom_call.1} parent=1 // pred_check
      _
    $region15: #{tpu_custom_call.1} parent=1 // pred_check_branch
      %53 = sbr.rel (0) target = $region17
    $region16: #{tpu_custom_call.1} parent=1 // pred_region
      %s55 = ssub.s32 256, 256
      %56 = vsyncadd [#allocation9], %s55
      %s57 = sshll.u32 [#allocation8], 4
      %s58 = int_to_ptr.vmem [resolvable:$true] %s57
      %63 = dma.hbm_to_vmem [thread:$0]  %s3, 256, %s58, [#allocation9], 64, 64, 4
    $region17: #{tpu_custom_call.1} parent=1 // pred_fallthru
      _
    // Predicated region
    $region18: #{tpu_custom_call.1} parent=1 // pred_check
      _
    $region19: #{tpu_custom_call.1} parent=1 // pred_check_branch
      %65 = sbr.rel (0) target = $region21
    $region20: #{tpu_custom_call.1} parent=1 // pred_region
      %66 = dma.done [#allocation3], 128
    $region21: #{tpu_custom_call.1} parent=1 // pred_fallthru
      _
    // Predicated region
    $region22: #{tpu_custom_call.1} parent=1 // pred_check
      _
    $region23: #{tpu_custom_call.1} parent=1 // pred_check_branch
      %68 = sbr.rel (0) target = $region25
    $region24: #{tpu_custom_call.1} parent=1 // pred_region
      %69 = dma.done [#allocation6], 128
    $region25: #{tpu_custom_call.1} parent=1 // pred_fallthru
      _
    // Predicated region
    $region26: #{tpu_custom_call.1} parent=1 // pred_check
      _
    $region27: #{tpu_custom_call.1} parent=1 // pred_check_branch
      %71 = sbr.rel (0) target = $region29
    $region28: #{tpu_custom_call.1} parent=1 // pred_region
      %72 = dma.done [#allocation6], 256
    $region29: #{tpu_custom_call.1} parent=1 // pred_fallthru
      _
    // Predicated region
    $region30: #{tpu_custom_call.1} parent=1 // pred_check
      _
    $region31: #{tpu_custom_call.1} parent=1 // pred_check_branch
      %74 = sbr.rel (0) target = $region33
    $region32: #{tpu_custom_call.1} parent=1 // pred_region
      %75 = dma.done [#allocation9], 256
    $region33: #{tpu_custom_call.1} parent=1 // pred_fallthru
      _
    %v76 = vld [vmem:[#allocation2] sm:$0xf]
    %v77 = vld [vmem:[#allocation2 + $0x4] sm:$0xf]
    %v78 = vld [vmem:[#allocation5] sm:$0xf]
    %v79 = vld [vmem:[#allocation5 + $0x4] sm:$0xf]
    %v80 = vld [vmem:[#allocation7] sm:$0xf]
    %v81 = vld [vmem:[#allocation7 + $0x4] sm:$0xf]
    %v82 = vld [vmem:[#allocation7 + $0x8] sm:$0xf]
    %v83 = vld [vmem:[#allocation7 + $0xc] sm:$0xf]
    %v84 = vld [vmem:[#allocation8] sm:$0xf]
    %v85 = vld [vmem:[#allocation8 + $0x4] sm:$0xf]
    %v86 = vld [vmem:[#allocation8 + $0x8] sm:$0xf]
    %v87 = vld [vmem:[#allocation8 + $0xc] sm:$0xf]
    %v88 = vlaneseq
    %v89 = vshrl.u32 %v88, 7
    %v90 = vsub.s32 0, %v89
    %v91 = vrot.slane %v76, %v90
    %v92 = vlaneseq
    %v93 = vshrl.u32 %v92, 7
    %v94 = vsub.s32 0, %v93
    %v95 = vrot.slane %v77, %v94
    %v96 = vmul.f32 %v91, %v80
    %v97 = vmul.f32 %v95, %v80
    %v98 = vlaneseq
    %v99 = vshrl.u32 %v98, 7
    %v100 = vsub.s32 0, %v99
    %v101 = vrot.slane %v78, %v100
    %v102 = vlaneseq
    %v103 = vshrl.u32 %v102, 7
    %v104 = vsub.s32 0, %v103
    %v105 = vrot.slane %v79, %v104
    %v106 = vmul.f32 %v101, %v84
    %v107 = vmul.f32 %v105, %v84
    %v108 = vsub.f32 %v96, %v106
    %v109 = vsub.f32 %v97, %v107
    %v110 = vadd.f32 %v108, 0.0
    %v111 = vadd.f32 %v109, 0.0
    %v112 = vmul.f32 %v91, %v84
    %v113 = vmul.f32 %v95, %v84
    %v114 = vmul.f32 %v101, %v80
    %v115 = vmul.f32 %v105, %v80
    %v116 = vadd.f32 %v112, %v114
    %v117 = vadd.f32 %v113, %v115
    %v118 = vadd.f32 %v116, 0.0
    %v119 = vadd.f32 %v117, 0.0
    %v120 = vlaneseq
    %v121 = vshrl.u32 %v120, 7
    %v122 = vsub.s32 1, %v121
    %v123 = vrot.slane %v76, %v122
    %v124 = vlaneseq
    %v125 = vshrl.u32 %v124, 7
    %v126 = vsub.s32 1, %v125
    %v127 = vrot.slane %v77, %v126
    %v128 = vmul.f32 %v123, %v81
    %v129 = vmul.f32 %v127, %v81
    %v130 = vlaneseq
    %v131 = vshrl.u32 %v130, 7
    %v132 = vsub.s32 1, %v131
    %v133 = vrot.slane %v78, %v132
    %v134 = vlaneseq
    %v135 = vshrl.u32 %v134, 7
    %v136 = vsub.s32 1, %v135
    %v137 = vrot.slane %v79, %v136
    %v138 = vmul.f32 %v133, %v85
    %v139 = vmul.f32 %v137, %v85
    %v140 = vsub.f32 %v128, %v138
    %v141 = vsub.f32 %v129, %v139
    %v142 = vadd.f32 %v110, %v140
    %v143 = vadd.f32 %v111, %v141
    %v144 = vmul.f32 %v123, %v85
    %v145 = vmul.f32 %v127, %v85
    %v146 = vmul.f32 %v133, %v81
    %v147 = vmul.f32 %v137, %v81
    %v148 = vadd.f32 %v144, %v146
    %v149 = vadd.f32 %v145, %v147
    %v150 = vadd.f32 %v118, %v148
    %v151 = vadd.f32 %v119, %v149
    %v152 = vlaneseq
    %v153 = vshrl.u32 %v152, 7
    %v154 = vsub.s32 2, %v153
    %v155 = vrot.slane %v76, %v154
    %v156 = vlaneseq
    %v157 = vshrl.u32 %v156, 7
    %v158 = vsub.s32 2, %v157
    %v159 = vrot.slane %v77, %v158
    %v160 = vmul.f32 %v155, %v82
    %v161 = vmul.f32 %v159, %v82
    %v162 = vlaneseq
    %v163 = vshrl.u32 %v162, 7
    %v164 = vsub.s32 2, %v163
    %v165 = vrot.slane %v78, %v164
    %v166 = vlaneseq
    %v167 = vshrl.u32 %v166, 7
    %v168 = vsub.s32 2, %v167
    %v169 = vrot.slane %v79, %v168
    %v170 = vmul.f32 %v165, %v86
    %v171 = vmul.f32 %v169, %v86
    %v172 = vsub.f32 %v160, %v170
    %v173 = vsub.f32 %v161, %v171
    %v174 = vadd.f32 %v142, %v172
    %v175 = vadd.f32 %v143, %v173
    %v176 = vmul.f32 %v155, %v86
    %v177 = vmul.f32 %v159, %v86
    %v178 = vmul.f32 %v165, %v82
    %v179 = vmul.f32 %v169, %v82
    %v180 = vadd.f32 %v176, %v178
    %v181 = vadd.f32 %v177, %v179
    %v182 = vadd.f32 %v150, %v180
    %v183 = vadd.f32 %v151, %v181
    %v184 = vlaneseq
    %v185 = vshrl.u32 %v184, 7
    %v186 = vsub.s32 3, %v185
    %v187 = vrot.slane %v76, %v186
    %v188 = vlaneseq
    %v189 = vshrl.u32 %v188, 7
    %v190 = vsub.s32 3, %v189
    %v191 = vrot.slane %v77, %v190
    %v192 = vmul.f32 %v187, %v83
    %v193 = vmul.f32 %v191, %v83
    %v194 = vlaneseq
    %v195 = vshrl.u32 %v194, 7
    %v196 = vsub.s32 3, %v195
    %v197 = vrot.slane %v78, %v196
    %v198 = vlaneseq
    %v199 = vshrl.u32 %v198, 7
    %v200 = vsub.s32 3, %v199
    %v201 = vrot.slane %v79, %v200
    %v202 = vmul.f32 %v197, %v87
    %v203 = vmul.f32 %v201, %v87
    %v204 = vsub.f32 %v192, %v202
    %v205 = vsub.f32 %v193, %v203
    %v206 = vadd.f32 %v174, %v204
    %v207 = vadd.f32 %v175, %v205
    %v208 = vmul.f32 %v187, %v87
    %v209 = vmul.f32 %v191, %v87
    %v210 = vmul.f32 %v197, %v83
    %v211 = vmul.f32 %v201, %v83
    %v212 = vadd.f32 %v208, %v210
    %v213 = vadd.f32 %v209, %v211
    %v214 = vadd.f32 %v182, %v212
    %v215 = vadd.f32 %v183, %v213
    %vm216 = vcmask 27648
    %217 = vst.msk [vmem:[#allocation10] sm:$0xf] %vm216, %v206
    %218 = vst.msk [vmem:[#allocation10 + $0x4] sm:$0xf] %vm216, %v207
    %219 = vst.msk [vmem:[#allocation11] sm:$0xf] %vm216, %v214
    %220 = vst.msk [vmem:[#allocation11 + $0x4] sm:$0xf] %vm216, %v215
    // Predicated region
    $region34: #{tpu_custom_call.1} parent=1 // pred_check
      _
    $region35: #{tpu_custom_call.1} parent=1 // pred_check_branch
      %222 = sbr.rel (0) target = $region37
    $region36: #{tpu_custom_call.1} parent=1 // pred_region
      %s224 = ssub.s32 128, 128
      %225 = vsyncadd [#allocation4], %s224
      %s226 = sshll.u32 [#allocation10], 4
      %s227 = int_to_ptr.vmem [resolvable:$true] %s226
      %232 = dma.vmem_to_hbm [thread:$0]  %s227, 128, %s4, [#allocation4], 64, 64, 4
    $region37: #{tpu_custom_call.1} parent=1 // pred_fallthru
      _
    // Predicated region
    $region38: #{tpu_custom_call.1} parent=1 // pred_check
      _
    $region39: #{tpu_custom_call.1} parent=1 // pred_check_branch
      %234 = sbr.rel (0) target = $region41
    $region40: #{tpu_custom_call.1} parent=1 // pred_region
      %s236 = ssub.s32 128, 128
      %237 = vsyncadd [#allocation12], %s236
      %s238 = sshll.u32 [#allocation11], 4
      %s239 = int_to_ptr.vmem [resolvable:$true] %s238
      %244 = dma.vmem_to_hbm [thread:$0]  %s239, 128, %s5, [#allocation12], 64, 64, 4
    $region41: #{tpu_custom_call.1} parent=1 // pred_fallthru
      _
    // Predicated region
    $region42: #{tpu_custom_call.1} parent=1 // pred_check
      _
    $region43: #{tpu_custom_call.1} parent=1 // pred_check_branch
      %246 = sbr.rel (0) target = $region45
    $region44: #{tpu_custom_call.1} parent=1 // pred_region
      %247 = dma.done [#allocation4], 128
    $region45: #{tpu_custom_call.1} parent=1 // pred_fallthru
      _
    // Predicated region
    $region46: #{tpu_custom_call.1} parent=1 // pred_check
      _
    $region47: #{tpu_custom_call.1} parent=1 // pred_check_branch
      %249 = sbr.rel (0) target = $region49
    $region48: #{tpu_custom_call.1} parent=1 // pred_region
      %250 = dma.done [#allocation12], 128
    $region49: #{tpu_custom_call.1} parent=1 // pred_fallthru
      _
    %251 = vsyncpa [#allocation3], 1
    %252 = vsyncpa [#allocation6], 1
    %253 = vsyncpa [#allocation9], 1
    %254 = vsyncpa [#allocation4], 1
    %255 = vsyncpa [#allocation12], 1

</llo_original>
